<compile_context>
chip_gen: v6e
topology: v6e:2x2x1
jax: 0.10.0
libtpu: 0.0.40
codegen_flags: <defaults>
</compile_context>

<pallas_src>
import functools

import jax
import jax.numpy as jnp
from jax import lax
from jax.experimental import pallas as pl
from jax.experimental.pallas import tpu as pltpu

_LANE = 128
_SUBLANE = 8
_MAX_CHUNK = 128          # cap on rows processed per in-kernel chunk
_CHUNK_BYTES = 2 << 20    # target bytes for one (chunk, C) f32 slab


def _round_up(x, m):
    return (x + m - 1) // m * m


def _prob_ce_kernel(x_ref, t_ref, *rest, n_rows, tile_n, chunk, weighted):
    """One grid step: stream a (tile_n, C) row tile, emit a (1, C) f32 partial sum.

    Rows past the true batch size are masked in-kernel (no wrapper padding), and the
    f32 working set is bounded by processing `chunk` rows at a time.
    """
    if weighted:
        w_ref, out_ref = rest
        w_col = w_ref[...].astype(jnp.float32)          # (C, 1), hoisted out of the loop
    else:
        (out_ref,) = rest

    c_dim = x_ref.shape[1]
    n_chunks = tile_n // chunk
    base = pl.program_id(0) * tile_n                    # global row offset of this tile
    eps = jnp.float32(1e-9)

    def chunk_body(c, acc):
        off = pl.multiple_of(c * chunk, chunk)
        x = x_ref[pl.ds(off, chunk), :].astype(jnp.float32)
        t = t_ref[pl.ds(off, chunk), :].astype(jnp.float32)

        # Rows beyond the true batch (last tile / OOB block rows) are forced to eps so
        # their contribution is exactly eps * (log(eps) - log(eps)) = 0.
        row = base + off + lax.broadcasted_iota(jnp.int32, x.shape, 0)
        valid = row < n_rows
        x = jnp.where(valid, jnp.maximum(x, eps), eps)
        t = jnp.where(valid, jnp.maximum(t, eps), eps)

        kld = t * (jnp.log(t) - jnp.log(x))             # matches the reference formula

        if weighted:
            # sample_weight = weight[argmax_c(target)], first-occurrence tie-break.
            lane = lax.broadcasted_iota(jnp.int32, t.shape, 1)
            rowmax = jnp.max(t, axis=1, keepdims=True)                       # XLU pass 1
            idx = jnp.min(jnp.where(t == rowmax, lane, c_dim),
                          axis=1, keepdims=True)                             # XLU pass 2
            onehot = (lane == idx).astype(jnp.float32)                       # (chunk, C)
            # Weight lookup as a one-hot matmul -> runs on the otherwise-idle MXU.
            sw = jnp.dot(onehot, w_col, preferred_element_type=jnp.float32)  # (chunk, 1)
            kld = kld * sw

        return acc + jnp.sum(kld, axis=0, keepdims=True)                     # (1, C)

    acc0 = jnp.zeros((1, c_dim), jnp.float32)
    if n_chunks == 1:
        acc = chunk_body(0, acc0)
    else:
        acc = lax.fori_loop(0, n_chunks, chunk_body, acc0, unroll=(n_chunks <= 8))
    out_ref[0] = acc


def _choose_tiling(N, C, in_dtype, tgt_dtype, tile_n=None):
    """Pick (tile_n, chunk, c_lanes): tile_n from the DMA budget, chunk from C."""
    c_lanes = _round_up(C, _LANE)                        # VMEM lane padding (accounting)
    itemsize = jnp.dtype(in_dtype).itemsize + jnp.dtype(tgt_dtype).itemsize

    if tile_n is None:
        # Conservative double-buffered streaming-input budget so inputs + the f32 chunk
        # working set stay well inside v7x's 64 MiB/TC VMEM (v5e/v6e have 128 MiB and
        # tolerate more, but 16 MiB already gives large tiles / few grid steps).
        budget = 16 << 20
        per_row_db = 2 * c_lanes * itemsize
        t = budget // max(per_row_db, 1)
        t = max(_SUBLANE, min(t, 4096))
        # Keep >= 2 grid steps whenever possible so both v7x TensorCores get work.
        t = min(t, max(_SUBLANE, _round_up(-(-N // 2), _SUBLANE)))
    else:
        t = max(_SUBLANE, int(tile_n))
    t = min(t, _round_up(N, _SUBLANE))
    t = max(_SUBLANE, t // _SUBLANE * _SUBLANE)

    # Row chunk bounds the in-kernel f32 slab to ~_CHUNK_BYTES regardless of tile size.
    desired = max(_SUBLANE,
                  min(_MAX_CHUNK, (_CHUNK_BYTES // (c_lanes * 4)) // _SUBLANE * _SUBLANE))
    if t >= desired:
        t = t // desired * desired                       # tile_n is a multiple of chunk
        chunk = desired
    else:
        chunk = t
    return t, chunk, c_lanes


def prob_cross_entropy_loss(inp, target, weight=None, *, tile_n=None):
    """Pallas implementation of ProbCrossEntropyLoss.forward. Returns a scalar float32."""
    N, C = inp.shape
    assert target.shape == (N, C), "input/target must both be (N, C)"

    tile_n, chunk, c_lanes = _choose_tiling(N, C, inp.dtype, target.dtype, tile_n)
    num_tiles = pl.cdiv(N, tile_n)
    weighted = weight is not None

    in_specs = [
        pl.BlockSpec((tile_n, C), lambda i: (i, 0)),     # input rows (no wrapper pad)
        pl.BlockSpec((tile_n, C), lambda i: (i, 0)),     # target rows
    ]
    args = [inp, target]
    if weighted:
        assert weight.shape == (C,)
        args.append(weight.astype(jnp.float32).reshape(C, 1))
        in_specs.append(pl.BlockSpec((C, 1), lambda i: (0, 0)))   # resident class weights

    kernel = functools.partial(_prob_ce_kernel, n_rows=N, tile_n=tile_n,
                               chunk=chunk, weighted=weighted)

    # VMEM budget: double-buffered inputs + f32 chunk working set + partials + weights.
    itemsize = jnp.dtype(inp.dtype).itemsize + jnp.dtype(target.dtype).itemsize
    in_bytes = 2 * tile_n * c_lanes * itemsize
    work_bytes = 6 * chunk * c_lanes * 4                 # x/t/kld f32 + temporaries
    out_bytes = 2 * _SUBLANE * c_lanes * 4
    w_bytes = 2 * _round_up(C, _SUBLANE) * _LANE * 4 if weighted else 0
    vmem_limit = int(min(56 << 20,
                         max(16 << 20,
                             in_bytes + work_bytes + out_bytes + w_bytes + (4 << 20))))

    cost = pl.CostEstimate(
        flops=int((8 if weighted else 6) * N * C),
        transcendentals=int(2 * N * C),                  # two logs per element
        bytes_accessed=int(N * C * itemsize + num_tiles * C * 4
                           + (C * 4 if weighted else 0)),
    )

    partials = pl.pallas_call(
        kernel,
        out_shape=jax.ShapeDtypeStruct((num_tiles, 1, C), jnp.float32),
        grid_spec=pltpu.PrefetchScalarGridSpec(
            num_scalar_prefetch=0,
            grid=(num_tiles,),
            in_specs=in_specs,
            out_specs=pl.BlockSpec((1, 1, C), lambda i: (i, 0, 0)),
        ),
        compiler_params=pltpu.CompilerParams(
            dimension_semantics=("parallel",),           # independent per-tile partials
            vmem_limit_bytes=vmem_limit,
        ),
        cost_estimate=cost,
    )(*args)

    # Tiny cross-tile/cross-lane reduction, then mean over the true batch size.
    return jnp.sum(partials) / jnp.float32(N)


def _reference(inp, target, weight):
    """Pure-JAX reference matching the PyTorch forward exactly."""
    x = jnp.maximum(inp.astype(jnp.float32), 1e-9)
    t = jnp.maximum(target.astype(jnp.float32), 1e-9)
    kld = t * (jnp.log(t) - jnp.log(x))
    if weight is not None:
        sw = weight.astype(jnp.float32)[jnp.argmax(t, axis=1)]
        kld = kld * sw[:, None]
    return jnp.mean(jnp.sum(kld, axis=1))


if __name__ == "__main__":
    key = jax.random.PRNGKey(0)
    k1, k2, k3, k4, k5, k6 = jax.random.split(key, 6)

    # Case 1: weighted, aligned small shape.
    N, C = 8, 32
    inp = jax.nn.softmax(jax.random.normal(k1, (N, C), jnp.float32), axis=-1)
    target = jax.nn.softmax(2.0 * jax.random.normal(k2, (N, C), jnp.float32), axis=-1)
    weight = jnp.linspace(0.5, 1.5, C, dtype=jnp.float32)
    loss = jax.block_until_ready(prob_cross_entropy_loss(inp, target, weight))
    ref = _reference(inp, target, weight)
    assert jnp.allclose(loss, ref, rtol=1e-5, atol=1e-6), (loss, ref)

    # Case 2: unaligned shape (exercises in-kernel row masking and ragged C), w/ + w/o weight.
    N2, C2 = 13, 40
    inp2 = jax.nn.softmax(jax.random.normal(k3, (N2, C2), jnp.float32), axis=-1)
    target2 = jax.nn.softmax(2.0 * jax.random.normal(k4, (N2, C2), jnp.float32), axis=-1)
    weight2 = jnp.linspace(0.25, 2.0, C2, dtype=jnp.float32)
    loss2 = jax.block_until_ready(prob_cross_entropy_loss(inp2, target2, weight2))
    ref2 = _reference(inp2, target2, weight2)
    assert jnp.allclose(loss2, ref2, rtol=1e-5, atol=1e-6), (loss2, ref2)
    loss3 = jax.block_until_ready(prob_cross_entropy_loss(inp2, target2, None))
    ref3 = _reference(inp2, target2, None)
    assert jnp.allclose(loss3, ref3, rtol=1e-5, atol=1e-6), (loss3, ref3)

    # Case 3: bf16 inputs, multi-tile + multi-chunk + ragged last tile (tile_n override).
    N3, C3 = 300, 257
    inp3 = jax.nn.softmax(jax.random.normal(k5, (N3, C3), jnp.float32), axis=-1).astype(jnp.bfloat16)
    target3 = jax.nn.softmax(2.0 * jax.random.normal(k6, (N3, C3), jnp.float32), axis=-1).astype(jnp.bfloat16)
    weight3 = jnp.linspace(0.5, 1.5, C3, dtype=jnp.float32)
    loss4 = jax.block_until_ready(prob_cross_entropy_loss(inp3, target3, weight3, tile_n=256))
    ref4 = _reference(inp3, target3, weight3)
    assert jnp.allclose(loss4, ref4, rtol=1e-4, atol=1e-5), (loss4, ref4)
    loss5 = jax.block_until_ready(prob_cross_entropy_loss(inp3, target3, None))
    ref5 = _reference(inp3, target3, None)
    assert jnp.allclose(loss5, ref5, rtol=1e-4, atol=1e-5), (loss5, ref5)

    print("KERNEL_OK")
</pallas_src>

<mosaic_0001>
module attributes {stable_mosaic.version = 11 : i64} {
  func.func @_prob_ce_kernel(%arg0: i32, %arg1: memref<8x32xf32, #tpu.memory_space<vmem>>, %arg2: memref<8x32xf32, #tpu.memory_space<vmem>>, %arg3: memref<32x1xf32, #tpu.memory_space<vmem>>, %arg4: memref<1x1x32xf32, #tpu.memory_space<vmem>>) attributes {dimension_semantics = [#tpu.dimension_semantics<parallel>], iteration_bounds = array<i64: 1>, scalar_prefetch = 0 : i64, scratch_operands = 0 : i64, tpu.core_type = #tpu.core_type<tc>, window_params = [{transform_indices = @transform_0, window_bounds = array<i64: 8, 32>}, {transform_indices = @transform_1, window_bounds = array<i64: 8, 32>}, {pipeline_mode = #tpu.pipeline_mode<synchronous>, transform_indices = @transform_2, window_bounds = array<i64: 32, 1>}, {transform_indices = @transform_3, window_bounds = array<i64: 1, 1, 32>}]} {
    %c0 = arith.constant 0 : index
    %c0_0 = arith.constant 0 : index
    %0 = vector.load %arg3[%c0, %c0_0] : memref<32x1xf32, #tpu.memory_space<vmem>>, vector<32x1xf32>
    %c8_i32 = arith.constant 8 : i32
    %1 = arith.muli %arg0, %c8_i32 : i32
    %cst = arith.constant 0.000000e+00 : f32
    %2 = vector.broadcast %cst : f32 to vector<1x32xf32>
    %c0_i32 = arith.constant 0 : i32
    %3 = tpu.assume_multiple %c0_i32, 8 : i32
    %4 = arith.index_cast %3 : i32 to index
    %c0_1 = arith.constant 0 : index
    %5 = vector.load %arg1[%4, %c0_1] : memref<8x32xf32, #tpu.memory_space<vmem>>, vector<8x32xf32>
    %6 = arith.index_cast %3 : i32 to index
    %c0_2 = arith.constant 0 : index
    %7 = vector.load %arg2[%6, %c0_2] : memref<8x32xf32, #tpu.memory_space<vmem>>, vector<8x32xf32>
    %8 = arith.addi %1, %3 : i32
    %9 = tpu.iota {dimensions = array<i32: 0>} : vector<8x32xi32>
    %10 = vector.broadcast %8 : i32 to vector<8x32xi32>
    %11 = arith.addi %10, %9 : vector<8x32xi32>
    %c8_i32_3 = arith.constant 8 : i32
    %12 = vector.broadcast %c8_i32_3 : i32 to vector<8x32xi32>
    %13 = arith.cmpi slt, %11, %12 : vector<8x32xi32>
    %cst_4 = arith.constant 9.99999971E-10 : f32
    %14 = vector.broadcast %cst_4 : f32 to vector<8x32xf32>
    %15 = arith.maximumf %5, %14 : vector<8x32xf32>
    %cst_5 = arith.constant 9.99999971E-10 : f32
    %16 = vector.broadcast %cst_5 : f32 to vector<8x32xf32>
    %17 = arith.select %13, %15, %16 : vector<8x32xi1>, vector<8x32xf32>
    %cst_6 = arith.constant 9.99999971E-10 : f32
    %18 = vector.broadcast %cst_6 : f32 to vector<8x32xf32>
    %19 = arith.maximumf %7, %18 : vector<8x32xf32>
    %cst_7 = arith.constant 9.99999971E-10 : f32
    %20 = vector.broadcast %cst_7 : f32 to vector<8x32xf32>
    %21 = arith.select %13, %19, %20 : vector<8x32xi1>, vector<8x32xf32>
    %22 = math.log %21 : vector<8x32xf32>
    %23 = math.log %17 : vector<8x32xf32>
    %24 = arith.subf %22, %23 : vector<8x32xf32>
    %25 = arith.mulf %21, %24 : vector<8x32xf32>
    %26 = tpu.iota {dimensions = array<i32: 1>} : vector<8x32xi32>
    %cst_8 = arith.constant dense<0xFF800000> : vector<8xf32>
    %27 = vector.multi_reduction <maximumf>, %21, %cst_8 [1] : vector<8x32xf32> to vector<8xf32>
    %28 = vector.shape_cast %27 : vector<8xf32> to vector<8x1xf32>
    %29 = vector.broadcast %28 : vector<8x1xf32> to vector<8x32xf32>
    %30 = arith.cmpf oeq, %21, %29 : vector<8x32xf32>
    %c32_i32 = arith.constant 32 : i32
    %31 = vector.broadcast %c32_i32 : i32 to vector<8x32xi32>
    %32 = arith.select %30, %26, %31 : vector<8x32xi1>, vector<8x32xi32>
    %cst_9 = arith.constant dense<2147483647> : vector<8xi32>
    %33 = vector.multi_reduction <minsi>, %32, %cst_9 [1] : vector<8x32xi32> to vector<8xi32>
    %34 = vector.shape_cast %33 : vector<8xi32> to vector<8x1xi32>
    %35 = vector.broadcast %34 : vector<8x1xi32> to vector<8x32xi32>
    %36 = arith.cmpi eq, %26, %35 : vector<8x32xi32>
    %37 = arith.extui %36 : vector<8x32xi1> to vector<8x32xi32>
    %38 = arith.sitofp %37 : vector<8x32xi32> to vector<8x32xf32>
    %cst_10 = arith.constant dense<0.000000e+00> : vector<8x1xf32>
    %39 = tpu.matmul %38, %0, %cst_10 {dimension_numbers = #tpu.dot_dimension_numbers<[1], [0], [0], [1], [0, 0, 1, 1], [], []>} : vector<8x32xf32>, vector<32x1xf32>, vector<8x1xf32> -> vector<8x1xf32>
    %40 = vector.broadcast %39 : vector<8x1xf32> to vector<8x32xf32>
    %41 = arith.mulf %25, %40 : vector<8x32xf32>
    %cst_11 = arith.constant dense<0.000000e+00> : vector<32xf32>
    %42 = vector.multi_reduction <add>, %41, %cst_11 [0] : vector<8x32xf32> to vector<32xf32>
    %43 = vector.shape_cast %42 : vector<32xf32> to vector<1x32xf32>
    %44 = arith.addf %2, %43 : vector<1x32xf32>
    %c0_12 = arith.constant 0 : index
    %c0_13 = arith.constant 0 : index
    %c0_14 = arith.constant 0 : index
    %45 = vector.load %arg4[%c0_12, %c0_13, %c0_14] : memref<1x1x32xf32, #tpu.memory_space<vmem>>, vector<1x1x32xf32>
    %46 = vector.shape_cast %45 : vector<1x1x32xf32> to vector<1x32xf32>
    %47 = vector.shape_cast %44 : vector<1x32xf32> to vector<1x1x32xf32>
    tpu.vector_store %arg4[%c0_12, %c0_13, %c0_14], %47 {strides = array<i32>} : memref<1x1x32xf32, #tpu.memory_space<vmem>>, vector<1x1x32xf32>,
    return
  }
  func.func @transform_0(%arg0: i32) -> (i32, i32) {
    %c0_i32 = arith.constant 0 : i32
    %c0_i32_0 = arith.constant 0 : i32
    return %arg0, %c0_i32 : i32, i32
  }
  func.func @transform_1(%arg0: i32) -> (i32, i32) {
    %c0_i32 = arith.constant 0 : i32
    %c0_i32_0 = arith.constant 0 : i32
    return %arg0, %c0_i32 : i32, i32
  }
  func.func @transform_2(%arg0: i32) -> (i32, i32) {
    %c0_i32 = arith.constant 0 : i32
    %c0_i32_0 = arith.constant 0 : i32
    %c0_i32_1 = arith.constant 0 : i32
    return %c0_i32, %c0_i32_0 : i32, i32
  }
  func.func @transform_3(%arg0: i32) -> (i32, i32, i32) {
    %c0_i32 = arith.constant 0 : i32
    %c0_i32_0 = arith.constant 0 : i32
    %c0_i32_1 = arith.constant 0 : i32
    return %arg0, %c0_i32, %c0_i32_0 : i32, i32, i32
  }
}

</mosaic_0001>

<llo_original>
// kernel: tpu_custom_call.1
$region0: #{tpu_custom_call.1}
  #allocation0 [shape = 'u32[]', space=smem, size = 0x4, offset = 0x4, fixed_abs, tag = 'smem constant byte address 0x4 - core index']
  #allocation1 [shape = 'u32[144,128]{1,0:T(1,128)}', space=vmem, size = 0x12000, scoped, tag = 'internal scratch']
  %s0 = inlined_call_operand.vmem [shape: f32[8,32], index: 0, kind: input, shape index: {}]
  %s1 = inlined_call_operand.vmem [shape: f32[8,32], index: 1, kind: input, shape index: {}]
  %s2 = inlined_call_operand.vmem [shape: f32[32,1], index: 2, kind: input, shape index: {}]
  %s3 = inlined_call_operand.hbm [shape: f32[1,1,32], index: 3, kind: output, shape index: {}]
  %s4 = sld [smem:[#allocation0]]
  $region22: #{tpu_custom_call.1} parent=0
    _
  %s6 = ssub.s32 1, %s4
  %s7 = scalar_select 0, %s6, %s4
  $region1: #{tpu_custom_call.1} parent=0
    #allocation2 [shape = 'u8[512]{0}', space=vmem, size = 0x400, scoped, tag = 'output window, operand 0, single buffered']
    #allocation3 [shape = 's32[1]{0}', space=sflag, size = 0x4, scoped, tag = 'scoped memory for tpu_custom_call.1']
    %8 = vsyncpa [#allocation3], 0
    // Predicated region
    $region2: #{tpu_custom_call.1} parent=1 // pred_check
      _
    $region3: #{tpu_custom_call.1} parent=1 // pred_check_branch
      %10 = sbr.rel (0) target = $region5
    $region4: #{tpu_custom_call.1} parent=1 // pred_region
      _
    $region5: #{tpu_custom_call.1} parent=1 // pred_fallthru
      _
    // Predicated region
    $region6: #{tpu_custom_call.1} parent=1 // pred_check
      _
    $region7: #{tpu_custom_call.1} parent=1 // pred_check_branch
      %12 = sbr.rel (0) target = $region9
    $region8: #{tpu_custom_call.1} parent=1 // pred_region
      _
    $region9: #{tpu_custom_call.1} parent=1 // pred_fallthru
      _
    // Predicated region
    $region10: #{tpu_custom_call.1} parent=1 // pred_check
      _
    $region11: #{tpu_custom_call.1} parent=1 // pred_check_branch
      %14 = sbr.rel (0) target = $region13
    $region12: #{tpu_custom_call.1} parent=1 // pred_region
      _
    $region13: #{tpu_custom_call.1} parent=1 // pred_fallthru
      _
    %v15 = vld [vmem:[%s2] sm:$0xff]
    %v16 = vld [vmem:[%s2 + $0x8] sm:$0xff]
    %v17 = vld [vmem:[%s2 + $0x10] sm:$0xff]
    %v18 = vld [vmem:[%s2 + $0x18] sm:$0xff]
    %s19 = smul.u32 0, 8
    %v20 = vld [vmem:[%s0] sm:$0xff]
    %v21 = vld [vmem:[%s1] sm:$0xff]
    %s22 = sadd.s32 %s19, 0
    %v23 = vlaneseq
    %v24 = vshrl.u32 %v23, 7
    %v25 = vstv %s22
    %v26 = vadd.s32 %v25, %v24
    %vm27 = vcmp.lt.s32.totalorder %v26, 8
    %v28 = vmax.f32 %v20, 1e-09
    %v29 = vsel %vm27, %v28, 1e-09
    %v30 = vmax.f32 %v21, 1e-09
    %v31 = vsel %vm27, %v30, 1e-09
    %v32 = vlog2.pop %v31
    %v33 = vmul.f32 %v32, 0.6931472
    %v34 = vlog2.pop %v29
    %v35 = vmul.f32 %v34, 0.6931472
    %v36 = vsub.f32 %v33, %v35
    %v37 = vmul.f32 %v31, %v36
    %v38 = vlaneseq
    %v39 = vand.u32 %v38, 127
    %vm40 = vcmask 261120
    %v41 = vsel %vm40, %v31, -inf
    %42 = vmax.xlane.f32.xlu0 %v41
    %v43 = vpop.xlane.xlu0 %42
    %vm44 = vcmp.eq.f32.partialorder %v31, %v43
    %v45 = vsel %vm44, %v39, 32
    %v46 = vsel %vm40, %v45, 2147483647
    %v47 = vand.u32 %v46, 65535
    %v48 = vshra.s32 %v46, 16
    %v49 = vcvt.s32.f32 %v47
    %v50 = vcvt.s32.f32 %v48
    %51 = vmin.xlane.f32.xlu0 %v50
    %v52 = vpop.xlane.xlu0 %51
    %vm53 = vcmp.eq.f32.partialorder %v50, %v52
    %v54 = vsel %vm53, %v49, inf
    %55 = vmin.xlane.f32.xlu0 %v54
    %v56 = vpop.xlane.xlu0 %55
    %v57 = vcvt.f32.s32 %v56
    %v58 = vcvt.f32.s32 %v52
    %v59 = vshll.u32 %v58, 16
    %v60 = vadd.s32 %v59, %v57
    %vm61 = vcmp.eq.s32.totalorder %v39, %v60
    %v62 = vsel %vm61, 1, 0
    %v63 = vcvt.s32.f32 %v62
    %v65 = vsel %vm40, %v63, 0
    %67 = vmatprep.subr.mxu0 0.0
    %68 = vmatpush1.msra.mxu0 0.0
    %69 = vmatprep.subr.mxu0 0.0
    %70 = vmatpush1.msra.mxu0 0.0
    %71 = vmatprep.subr.mxu0 0.0
    %72 = vmatpush1.msra.mxu0 0.0
    %73 = vmatprep.subr.mxu0 0.0
    %74 = vmatpush1.msra.mxu0 0.0
    %75 = vmatprep.subr.mxu0 0.0
    %76 = vmatpush1.msra.mxu0 0.0
    %77 = vmatprep.subr.mxu0 0.0
    %78 = vmatpush1.msra.mxu0 0.0
    %79 = vmatprep.subr.mxu0 0.0
    %80 = vmatpush1.msra.mxu0 0.0
    %81 = vmatprep.subr.mxu0 0.0
    %82 = vmatpush1.msra.mxu0 0.0
    %83 = vmatprep.subr.mxu0 0.0
    %84 = vmatpush1.msra.mxu0 0.0
    %85 = vmatprep.subr.mxu0 0.0
    %86 = vmatpush1.msra.mxu0 0.0
    %87 = vmatprep.subr.mxu0 0.0
    %88 = vmatpush1.msra.mxu0 0.0
    %89 = vmatprep.subr.mxu0 0.0
    %90 = vmatpush1.msra.mxu0 0.0
    %91 = vmatprep.subr.mxu0 0.0
    %92 = vmatpush1.msra.mxu0 %v18
    %93 = vmatprep.subr.mxu0 0.0
    %94 = vmatpush1.msra.mxu0 %v17
    %95 = vmatprep.subr.mxu0 0.0
    %96 = vmatpush1.msra.mxu0 %v16
    %97 = vmatprep.subr.mxu0 0.0
    %98 = vmatpush1.msra.mxu0 %v15
    %99 = vmatprep.subr.mxu0 0.0
    %100 = vmatpush2.msra.mxu0 0.0
    %101 = vmatprep.subr.mxu0 0.0
    %102 = vmatpush2.msra.mxu0 0.0
    %103 = vmatprep.subr.mxu0 0.0
    %104 = vmatpush2.msra.mxu0 0.0
    %105 = vmatprep.subr.mxu0 0.0
    %106 = vmatpush2.msra.mxu0 0.0
    %107 = vmatprep.subr.mxu0 0.0
    %108 = vmatpush2.msra.mxu0 0.0
    %109 = vmatprep.subr.mxu0 0.0
    %110 = vmatpush2.msra.mxu0 0.0
    %111 = vmatprep.subr.mxu0 0.0
    %112 = vmatpush2.msra.mxu0 0.0
    %113 = vmatprep.subr.mxu0 0.0
    %114 = vmatpush2.msra.mxu0 0.0
    %115 = vmatprep.subr.mxu0 0.0
    %116 = vmatpush2.msra.mxu0 0.0
    %117 = vmatprep.subr.mxu0 0.0
    %118 = vmatpush2.msra.mxu0 0.0
    %119 = vmatprep.subr.mxu0 0.0
    %120 = vmatpush2.msra.mxu0 0.0
    %121 = vmatprep.subr.mxu0 0.0
    %122 = vmatpush2.msra.mxu0 0.0
    %123 = vmatprep.subr.mxu0 0.0
    %124 = vmatpush2.msra.mxu0 0.0
    %125 = vmatprep.subr.mxu0 0.0
    %126 = vmatpush2.msra.mxu0 0.0
    %127 = vmatprep.subr.mxu0 0.0
    %128 = vmatpush2.msra.mxu0 0.0
    %129 = vmatprep.subr.mxu0 0.0
    %130 = vmatpush2.msra.mxu0 0.0
    %131 = vmatprep.mubr.f32.mxu0 0.0
    %132 = vmatmul.mubr.f32.gmra.mxu0 %v65
    %v133 = vpop.f32.mrf.mxu0
    %v134 = vadd.f32 0.0, %v133
    %v135 = vpop.f32.mrf.mxu0
    %136 = vdwg.mxu0
    %138 = vset.pattern.permute.xlu0 0
    %139 = vperm.xlu0 %138, %v134
    %v140 = vpop.permute.xlu0 %139
    %v142 = vmul.f32 %v37, %v140
    %v143 = vsel %vm40, %v142, 0.0
    %v144 = vrot.slane %v143, 4
    %v145 = vadd.f32 %v143, %v144
    %v146 = vrot.slane %v145, 2
    %v147 = vadd.f32 %v145, %v146
    %v148 = vrot.slane %v147, 1
    %v149 = vadd.f32 %v147, %v148
    %v150 = vadd.f32 %v149, 0.0
    %vm151 = vcmask 253952
    %152 = vst.msk [vmem:[#allocation2] sm:$0x1] %vm151, %v150
    // Predicated region
    $region14: #{tpu_custom_call.1} parent=1 // pred_check
      _
    $region15: #{tpu_custom_call.1} parent=1 // pred_check_branch
      %154 = sbr.rel (0) target = $region17
    $region16: #{tpu_custom_call.1} parent=1 // pred_region
      %s156 = ssub.s32 16, 16
      %157 = vsyncadd [#allocation3], %s156
      %s159 = sshll.u32 [#allocation2], 4
      %s160 = int_to_ptr.vmem [resolvable:$true] %s159
      %162 = dma.vmem_to_hbm [thread:$0]  %s160, 16, %s3, [#allocation3]
    $region17: #{tpu_custom_call.1} parent=1 // pred_fallthru
      _
    // Predicated region
    $region18: #{tpu_custom_call.1} parent=1 // pred_check
      _
    $region19: #{tpu_custom_call.1} parent=1 // pred_check_branch
      %164 = sbr.rel (0) target = $region21
    $region20: #{tpu_custom_call.1} parent=1 // pred_region
      %165 = dma.done [#allocation3], 16
    $region21: #{tpu_custom_call.1} parent=1 // pred_fallthru
      _
    %166 = vsyncpa [#allocation3], 1

</llo_original>
